<compile_context>
chip_gen: v7x
topology: tpu7x:2x2x1
jax: 0.10.0
libtpu: 0.0.40
codegen_flags: <defaults>
</compile_context>

<pallas_src>
import functools

import jax
import jax.numpy as jnp
from jax.experimental import pallas as pl
from jax.experimental.pallas import tpu as pltpu


def _round_up(x, m):
    return ((x + m - 1) // m) * m


# ---------------------------------------------------------------------------
# One-time parameter preparation (hoisted out of the hot path).
# ---------------------------------------------------------------------------
def _build_gru_params(w_ih, w_hh, b_ih, b_hh, H, I, hp, compute_dtype):
    """Split 3*hp gate layout (r | z | n), transposed + lane-padded.

    W_x : (I , 3*hp)  input projection, applied once per chunk to C*Bp rows.
    W_h : (hp, 3*hp)  recurrent projection, resident in VMEM.
    b_x : (1 , 3*hp)  b_i{r,z,n} with b_h{r,z} pre-summed into the r/z blocks.
    b_hn: (1 ,   hp)  b_hn kept separate: n = tanh(i_n + b_in + r*(h_n + b_hn)).
    Padded rows/lanes are zero, so padding can never contaminate real lanes.
    """
    pad_c = lambda m: jnp.pad(m, ((0, 0), (0, hp - H)))
    pad_v = lambda v: jnp.pad(v, (0, hp - H))

    wih_t = jnp.transpose(w_ih)          # (I, 3H), gate order r, z, n
    whh_t = jnp.transpose(w_hh)          # (H, 3H)

    w_x = jnp.concatenate(
        [pad_c(wih_t[:, :H]), pad_c(wih_t[:, H:2 * H]), pad_c(wih_t[:, 2 * H:])],
        axis=1)                                            # (I, 3*hp)
    w_h = jnp.concatenate(
        [pad_c(whh_t[:, :H]), pad_c(whh_t[:, H:2 * H]), pad_c(whh_t[:, 2 * H:])],
        axis=1)
    w_h = jnp.pad(w_h, ((0, hp - H), (0, 0)))              # (hp, 3*hp)

    b_x = jnp.concatenate([
        pad_v(b_ih[:H] + b_hh[:H]),                        # r: b_ir + b_hr
        pad_v(b_ih[H:2 * H] + b_hh[H:2 * H]),              # z: b_iz + b_hz
        pad_v(b_ih[2 * H:]),                               # n: b_in only
    ]).reshape(1, 3 * hp).astype(jnp.float32)
    b_hn = pad_v(b_hh[2 * H:]).reshape(1, hp).astype(jnp.float32)

    return (w_x.astype(compute_dtype), w_h.astype(compute_dtype), b_x, b_hn)


# ---------------------------------------------------------------------------
# Kernel: C GRU timesteps per grid iteration; recurrence carried in vregs,
# chunk-boundary state in a VMEM scratch.
# ---------------------------------------------------------------------------
def _gru_chunk_kernel(x_ref, h0_ref, wx_ref, wh_ref, bx_ref, bhn_ref,
                      out_ref, h_scr, gx_scr, *, C, Bp, hp, compute_dtype,
                      unroll):
    @pl.when(pl.program_id(0) == 0)
    def _():
        h_scr[...] = h0_ref[...]                 # load initial hidden once

    # 1) Input projection for the WHOLE chunk: one big MXU matmul; input-side
    #    biases (and pre-summed b_h{r,z}) folded in exactly once per chunk.
    gx_scr[...] = (
        jnp.dot(x_ref[...].astype(compute_dtype), wx_ref[...],
                preferred_element_type=jnp.float32)
        + bx_ref[...])

    # Hoisted out of the time loop: resident weight view + bias broadcast.
    wh = wh_ref[...]                                       # (hp, 3*hp)
    bhn = jnp.broadcast_to(bhn_ref[...], (Bp, hp))         # (Bp, hp)

    # 2) Serial recurrence: per step only (Bp,hp)@(hp,3*hp) + gate math.
    def step(t, h):
        gh = jnp.dot(h.astype(compute_dtype), wh,
                     preferred_element_type=jnp.float32)   # (Bp, 3*hp)
        row = pl.multiple_of(t * Bp, Bp)                   # aligned row offset
        gx = gx_scr[pl.ds(row, Bp), :]                     # (Bp, 3*hp)

        r = jax.nn.sigmoid(gx[:, 0:hp] + gh[:, 0:hp])
        z = jax.nn.sigmoid(gx[:, hp:2 * hp] + gh[:, hp:2 * hp])
        n = jnp.tanh(gx[:, 2 * hp:3 * hp] + r * (gh[:, 2 * hp:3 * hp] + bhn))
        h_new = (1.0 - z) * n + z * h                      # f32 gate math

        out_ref[pl.ds(row, Bp), :] = h_new.astype(out_ref.dtype)
        return h_new                                       # carry in vregs

    h_final = jax.lax.fori_loop(0, C, step, h_scr[...], unroll=unroll)
    h_scr[...] = h_final                                   # chunk-boundary carry


def gru_sequence_pallas(x_seq, h0, w_x, w_h, b_x, b_hn, *, chunk=None,
                        unroll=4):
    """x_seq: (T, B, I), h0: (B, H) float -> (T, Bp, hp) f32 padded outputs."""
    T, B, I = x_seq.shape
    H = h0.shape[1]
    hp = w_h.shape[0]
    compute_dtype = w_x.dtype

    Bp = _round_up(B, 8)                         # sublane-dense batch rows
    C = max(1, min(T, 128 if chunk is None else int(chunk)))
    Tpad = _round_up(T, C)
    nc = Tpad // C

    x_p = jnp.pad(x_seq.astype(jnp.float32),
                  ((0, Tpad - T), (0, Bp - B), (0, 0)))
    x2d = x_p.reshape(Tpad * Bp, I).astype(compute_dtype)  # (Tpad*Bp, I)
    h0_p = jnp.pad(h0.astype(jnp.float32), ((0, Bp - B), (0, hp - H)))

    kernel = functools.partial(_gru_chunk_kernel, C=C, Bp=Bp, hp=hp,
                               compute_dtype=compute_dtype,
                               unroll=int(min(unroll, C)))

    out2d = pl.pallas_call(
        kernel,
        out_shape=jax.ShapeDtypeStruct((Tpad * Bp, hp), jnp.float32),
        grid=(nc,),
        in_specs=[
            pl.BlockSpec((C * Bp, I), lambda c: (c, 0)),     # streamed x chunk
            pl.BlockSpec((Bp, hp), lambda c: (0, 0)),        # resident h0
            pl.BlockSpec((I, 3 * hp), lambda c: (0, 0)),     # resident W_x
            pl.BlockSpec((hp, 3 * hp), lambda c: (0, 0)),    # resident W_h
            pl.BlockSpec((1, 3 * hp), lambda c: (0, 0)),     # resident b_x
            pl.BlockSpec((1, hp), lambda c: (0, 0)),         # resident b_hn
        ],
        out_specs=pl.BlockSpec((C * Bp, hp), lambda c: (c, 0)),  # lane-dense
        scratch_shapes=[
            pltpu.VMEM((Bp, hp), jnp.float32),               # h carry across chunks
            pltpu.VMEM((C * Bp, 3 * hp), jnp.float32),       # per-chunk Gx
        ],
        compiler_params=pltpu.CompilerParams(
            dimension_semantics=("arbitrary",),  # recurrence -> serial time axis
            vmem_limit_bytes=32 * 1024 * 1024,   # v7x-safe scoped limit
        ),
    )(x2d, h0_p, w_x, w_h, b_x, b_hn)

    return out2d.reshape(Tpad, Bp, hp)[:T]       # keep B/H padding for caller


# ---------------------------------------------------------------------------
# Module wrapper mirroring the PyTorch EncoderRNN.
# ---------------------------------------------------------------------------
class EncoderRNNPallas:
    """JAX/Pallas mirror of the PyTorch EncoderRNN (n_layers=1)."""

    def __init__(self, input_size, hidden_size, batch_size, key,
                 n_layers=1, compute_dtype=jnp.float32):
        assert n_layers == 1, "reference module uses n_layers=1"
        self.input_size = input_size
        self.hidden_size = hidden_size
        self.batch_size = batch_size
        self.hp = _round_up(hidden_size, 128)     # lane-aligned gate width

        k1, k2, k3, k4 = jax.random.split(key, 4)
        s = 1.0 / jnp.sqrt(jnp.float32(hidden_size))
        # PyTorch GRU init: U(-1/sqrt(H), 1/sqrt(H)); deterministic here.
        self.w_ih = jax.random.uniform(k1, (3 * hidden_size, input_size),
                                       jnp.float32, -s, s)
        self.w_hh = jax.random.uniform(k2, (3 * hidden_size, hidden_size),
                                       jnp.float32, -s, s)
        self.b_ih = jax.random.uniform(k3, (3 * hidden_size,), jnp.float32, -s, s)
        self.b_hh = jax.random.uniform(k4, (3 * hidden_size,), jnp.float32, -s, s)

        # Split / transposed / padded params built exactly once.
        self.w_x, self.w_h, self.b_x, self.b_hn = _build_gru_params(
            self.w_ih, self.w_hh, self.b_ih, self.b_hh,
            hidden_size, input_size, self.hp, compute_dtype)

    def init_hidden(self):
        return jnp.zeros((1, self.batch_size, self.hidden_size), jnp.float32)

    def encode_sequence(self, x_seq, h0, *, chunk=None):
        """Sequence-fused path. x_seq: (T, B, I), h0: (B, H)."""
        B = x_seq.shape[1]
        out_p = gru_sequence_pallas(x_seq, h0, self.w_x, self.w_h,
                                    self.b_x, self.b_hn, chunk=chunk)
        # Glue slice to the exact module shape; downstream code that can
        # consume the padded (T, Bp, hp) layout should take out_p directly.
        out = out_p[:, :B, :self.hidden_size]
        return out, out[-1]

    def __call__(self, f_input, hidden):
        # PyTorch forward: f_input (B, input_size), hidden (1, B, H).
        B = f_input.shape[0]
        x_seq = f_input.reshape(1, B, self.input_size)
        out, h_final = self.encode_sequence(x_seq, hidden[0])
        return out, h_final.reshape(1, B, self.hidden_size)


# ---------------------------------------------------------------------------
# Pure-JAX references for correctness checking.
# ---------------------------------------------------------------------------
def _reference_gru_cell(x, h, w_ih, w_hh, b_ih, b_hh):
    H = h.shape[1]
    gi = x @ w_ih.T + b_ih
    gh = h @ w_hh.T + b_hh
    i_r, i_z, i_n = gi[:, :H], gi[:, H:2 * H], gi[:, 2 * H:]
    h_r, h_z, h_n = gh[:, :H], gh[:, H:2 * H], gh[:, 2 * H:]
    r = jax.nn.sigmoid(i_r + h_r)
    z = jax.nn.sigmoid(i_z + h_z)
    n = jnp.tanh(i_n + r * h_n)
    return (1.0 - z) * n + z * h


def _reference_gru_sequence(x_seq, h0, w_ih, w_hh, b_ih, b_hh):
    def step(h, x):
        h_new = _reference_gru_cell(x, h, w_ih, w_hh, b_ih, b_hh)
        return h_new, h_new
    h_final, outs = jax.lax.scan(step, h0, x_seq)
    return outs, h_final


if __name__ == "__main__":
    key = jax.random.PRNGKey(0)
    k_param, k_x, k_seq = jax.random.split(key, 3)

    batch = 2
    input_size = 16
    hidden_size = 32
    seq_len = 8

    # --- f32 encoder: exact module semantics (single step, T=1 chunk) ------
    enc = EncoderRNNPallas(input_size, hidden_size, batch, k_param)

    f_input = jax.random.normal(k_x, (batch, input_size), jnp.float32)
    hidden = enc.init_hidden()

    output, hidden_out = enc(f_input, hidden)
    output = jax.block_until_ready(output)
    hidden_out = jax.block_until_ready(hidden_out)

    assert output.shape == (1, batch, hidden_size)
    assert hidden_out.shape == (1, batch, hidden_size)

    ref_step = _reference_gru_cell(f_input, hidden[0], enc.w_ih, enc.w_hh,
                                   enc.b_ih, enc.b_hh)
    assert jnp.allclose(output[0], ref_step, atol=1e-5, rtol=1e-5)
    assert jnp.allclose(hidden_out[0], ref_step, atol=1e-5, rtol=1e-5)

    # --- f32 encoder: sequence-fused path (single chunk over T) ------------
    x_seq = jax.random.normal(k_seq, (seq_len, batch, input_size), jnp.float32)
    out_seq, h_final = enc.encode_sequence(x_seq, hidden[0])
    out_seq = jax.block_until_ready(out_seq)
    h_final = jax.block_until_ready(h_final)

    ref_seq, ref_h = _reference_gru_sequence(x_seq, hidden[0], enc.w_ih,
                                             enc.w_hh, enc.b_ih, enc.b_hh)
    assert out_seq.shape == (seq_len, batch, hidden_size)
    assert jnp.allclose(out_seq, ref_seq, atol=1e-5, rtol=1e-5)
    assert jnp.allclose(h_final, ref_h, atol=1e-5, rtol=1e-5)

    # --- multi-chunk path: chunk=3 exercises grid carry + time padding -----
    out_mc, h_mc = enc.encode_sequence(x_seq, hidden[0], chunk=3)
    out_mc = jax.block_until_ready(out_mc)
    assert jnp.allclose(out_mc, ref_seq, atol=1e-5, rtol=1e-5)
    assert jnp.allclose(h_mc, ref_h, atol=1e-5, rtol=1e-5)

    # --- bf16-operand variant (v6e/v7x MXU path); f32 carry + gate math ----
    enc_bf16 = EncoderRNNPallas(input_size, hidden_size, batch, k_param,
                                compute_dtype=jnp.bfloat16)
    out_bf16, h_bf16 = enc_bf16.encode_sequence(x_seq, hidden[0])
    out_bf16 = jax.block_until_ready(out_bf16)
    assert jnp.allclose(out_bf16, ref_seq, atol=5e-2, rtol=5e-2)
    assert jnp.allclose(h_bf16, ref_h, atol=5e-2, rtol=5e-2)

    print("KERNEL_OK")
</pallas_src>

<mosaic_0001>
module attributes {stable_mosaic.version = 11 : i64} {
  func.func @_gru_chunk_kernel(%arg0: i32, %arg1: memref<8x16xf32, #tpu.memory_space<vmem>>, %arg2: memref<8x128xf32, #tpu.memory_space<vmem>>, %arg3: memref<16x384xf32, #tpu.memory_space<vmem>>, %arg4: memref<128x384xf32, #tpu.memory_space<vmem>>, %arg5: memref<1x384xf32, #tpu.memory_space<vmem>>, %arg6: memref<1x128xf32, #tpu.memory_space<vmem>>, %arg7: memref<8x128xf32, #tpu.memory_space<vmem>>, %arg8: memref<8x128xf32, #tpu.memory_space<vmem>>, %arg9: memref<8x384xf32, #tpu.memory_space<vmem>>) attributes {dimension_semantics = [#tpu.dimension_semantics<arbitrary>], iteration_bounds = array<i64: 1>, scalar_prefetch = 0 : i64, scratch_operands = 2 : i64, tpu.core_type = #tpu.core_type<tc>, window_params = [{transform_indices = @transform_0, window_bounds = array<i64: 8, 16>}, {pipeline_mode = #tpu.pipeline_mode<synchronous>, transform_indices = @transform_1, window_bounds = array<i64: 8, 128>}, {pipeline_mode = #tpu.pipeline_mode<synchronous>, transform_indices = @transform_2, window_bounds = array<i64: 16, 384>}, {pipeline_mode = #tpu.pipeline_mode<synchronous>, transform_indices = @transform_3, window_bounds = array<i64: 128, 384>}, {pipeline_mode = #tpu.pipeline_mode<synchronous>, transform_indices = @transform_4, window_bounds = array<i64: 1, 384>}, {pipeline_mode = #tpu.pipeline_mode<synchronous>, transform_indices = @transform_5, window_bounds = array<i64: 1, 128>}, {transform_indices = @transform_6, window_bounds = array<i64: 8, 128>}]} {
    %c0_i32 = arith.constant 0 : i32
    %0 = arith.cmpi eq, %arg0, %c0_i32 : i32
    %1 = arith.extui %0 : i1 to i32
    %c0_i32_0 = arith.constant 0 : i32
    %2 = arith.cmpi ne, %1, %c0_i32_0 : i32
    scf.if %2 {
      %c0_23 = arith.constant 0 : index
      %c0_24 = arith.constant 0 : index
      %50 = vector.load %arg2[%c0_23, %c0_24] : memref<8x128xf32, #tpu.memory_space<vmem>>, vector<8x128xf32>
      %c0_25 = arith.constant 0 : index
      %c0_26 = arith.constant 0 : index
      %51 = vector.load %arg8[%c0_25, %c0_26] : memref<8x128xf32, #tpu.memory_space<vmem>>, vector<8x128xf32>
      tpu.vector_store %arg8[%c0_25, %c0_26], %50 {strides = array<i32>} : memref<8x128xf32, #tpu.memory_space<vmem>>, vector<8x128xf32>,
    } else {
    }
    %c0 = arith.constant 0 : index
    %c0_1 = arith.constant 0 : index
    %3 = vector.load %arg1[%c0, %c0_1] : memref<8x16xf32, #tpu.memory_space<vmem>>, vector<8x16xf32>
    %c0_2 = arith.constant 0 : index
    %c0_3 = arith.constant 0 : index
    %4 = vector.load %arg3[%c0_2, %c0_3] : memref<16x384xf32, #tpu.memory_space<vmem>>, vector<16x384xf32>
    %cst = arith.constant dense<0.000000e+00> : vector<8x384xf32>
    %5 = tpu.matmul %3, %4, %cst {dimension_numbers = #tpu.dot_dimension_numbers<[1], [0], [0], [1], [0, 0, 1, 1], [], []>} : vector<8x16xf32>, vector<16x384xf32>, vector<8x384xf32> -> vector<8x384xf32>
    %c0_4 = arith.constant 0 : index
    %c0_5 = arith.constant 0 : index
    %6 = vector.load %arg5[%c0_4, %c0_5] : memref<1x384xf32, #tpu.memory_space<vmem>>, vector<1x384xf32>
    %7 = vector.broadcast %6 : vector<1x384xf32> to vector<8x384xf32>
    %8 = arith.addf %5, %7 : vector<8x384xf32>
    %c0_6 = arith.constant 0 : index
    %c0_7 = arith.constant 0 : index
    %9 = vector.load %arg9[%c0_6, %c0_7] : memref<8x384xf32, #tpu.memory_space<vmem>>, vector<8x384xf32>
    tpu.vector_store %arg9[%c0_6, %c0_7], %8 {strides = array<i32>} : memref<8x384xf32, #tpu.memory_space<vmem>>, vector<8x384xf32>,
    %c0_8 = arith.constant 0 : index
    %c0_9 = arith.constant 0 : index
    %10 = vector.load %arg4[%c0_8, %c0_9] : memref<128x384xf32, #tpu.memory_space<vmem>>, vector<128x384xf32>
    %c0_10 = arith.constant 0 : index
    %c0_11 = arith.constant 0 : index
    %11 = vector.load %arg6[%c0_10, %c0_11] : memref<1x128xf32, #tpu.memory_space<vmem>>, vector<1x128xf32>
    %12 = vector.shape_cast %11 : vector<1x128xf32> to vector<1x128xf32>
    %13 = vector.broadcast %12 : vector<1x128xf32> to vector<8x128xf32>
    %c0_12 = arith.constant 0 : index
    %c0_13 = arith.constant 0 : index
    %14 = vector.load %arg8[%c0_12, %c0_13] : memref<8x128xf32, #tpu.memory_space<vmem>>, vector<8x128xf32>
    %c0_i32_14 = arith.constant 0 : i32
    %cst_15 = arith.constant dense<0.000000e+00> : vector<8x384xf32>
    %15 = tpu.matmul %14, %10, %cst_15 {dimension_numbers = #tpu.dot_dimension_numbers<[1], [0], [0], [1], [0, 0, 1, 1], [], []>} : vector<8x128xf32>, vector<128x384xf32>, vector<8x384xf32> -> vector<8x384xf32>
    %c8_i32 = arith.constant 8 : i32
    %16 = arith.muli %c0_i32_14, %c8_i32 : i32
    %17 = tpu.assume_multiple %16, 8 : i32
    %18 = arith.index_cast %17 : i32 to index
    %c0_16 = arith.constant 0 : index
    %19 = vector.load %arg9[%18, %c0_16] : memref<8x384xf32, #tpu.memory_space<vmem>>, vector<8x384xf32>
    %20 = vector.extract_strided_slice %19 {offsets = [0, 0], sizes = [8, 128], strides = [1, 1]} : vector<8x384xf32> to vector<8x128xf32>
    %21 = vector.extract_strided_slice %15 {offsets = [0, 0], sizes = [8, 128], strides = [1, 1]} : vector<8x384xf32> to vector<8x128xf32>
    %22 = arith.addf %20, %21 : vector<8x128xf32>
    %23 = arith.negf %22 : vector<8x128xf32>
    %24 = math.exp %23 : vector<8x128xf32>
    %cst_17 = arith.constant 1.000000e+00 : f32
    %25 = vector.broadcast %cst_17 : f32 to vector<8x128xf32>
    %26 = arith.addf %25, %24 : vector<8x128xf32>
    %27 = arith.divf %25, %26 : vector<8x128xf32>
    %28 = vector.extract_strided_slice %19 {offsets = [0, 128], sizes = [8, 128], strides = [1, 1]} : vector<8x384xf32> to vector<8x128xf32>
    %29 = vector.extract_strided_slice %15 {offsets = [0, 128], sizes = [8, 128], strides = [1, 1]} : vector<8x384xf32> to vector<8x128xf32>
    %30 = arith.addf %28, %29 : vector<8x128xf32>
    %31 = arith.negf %30 : vector<8x128xf32>
    %32 = math.exp %31 : vector<8x128xf32>
    %cst_18 = arith.constant 1.000000e+00 : f32
    %33 = vector.broadcast %cst_18 : f32 to vector<8x128xf32>
    %34 = arith.addf %33, %32 : vector<8x128xf32>
    %35 = arith.divf %33, %34 : vector<8x128xf32>
    %36 = vector.extract_strided_slice %19 {offsets = [0, 256], sizes = [8, 128], strides = [1, 1]} : vector<8x384xf32> to vector<8x128xf32>
    %37 = vector.extract_strided_slice %15 {offsets = [0, 256], sizes = [8, 128], strides = [1, 1]} : vector<8x384xf32> to vector<8x128xf32>
    %38 = arith.addf %37, %13 : vector<8x128xf32>
    %39 = arith.mulf %27, %38 : vector<8x128xf32>
    %40 = arith.addf %36, %39 : vector<8x128xf32>
    %41 = math.tanh %40 : vector<8x128xf32>
    %cst_19 = arith.constant 1.000000e+00 : f32
    %42 = vector.broadcast %cst_19 : f32 to vector<8x128xf32>
    %43 = arith.subf %42, %35 : vector<8x128xf32>
    %44 = arith.mulf %43, %41 : vector<8x128xf32>
    %45 = arith.mulf %35, %14 : vector<8x128xf32>
    %46 = arith.addf %44, %45 : vector<8x128xf32>
    %47 = arith.index_cast %17 : i32 to index
    %c0_20 = arith.constant 0 : index
    %48 = vector.load %arg7[%47, %c0_20] : memref<8x128xf32, #tpu.memory_space<vmem>>, vector<8x128xf32>
    tpu.vector_store %arg7[%47, %c0_20], %46 {strides = array<i32>} : memref<8x128xf32, #tpu.memory_space<vmem>>, vector<8x128xf32>,
    %c1_i32 = arith.constant 1 : i32
    %c0_21 = arith.constant 0 : index
    %c0_22 = arith.constant 0 : index
    %49 = vector.load %arg8[%c0_21, %c0_22] : memref<8x128xf32, #tpu.memory_space<vmem>>, vector<8x128xf32>
    tpu.vector_store %arg8[%c0_21, %c0_22], %46 {strides = array<i32>} : memref<8x128xf32, #tpu.memory_space<vmem>>, vector<8x128xf32>,
    return
  }
  func.func @transform_0(%arg0: i32) -> (i32, i32) {
    %c0_i32 = arith.constant 0 : i32
    %c0_i32_0 = arith.constant 0 : i32
    return %arg0, %c0_i32 : i32, i32
  }
  func.func @transform_1(%arg0: i32) -> (i32, i32) {
    %c0_i32 = arith.constant 0 : i32
    %c0_i32_0 = arith.constant 0 : i32
    %c0_i32_1 = arith.constant 0 : i32
    return %c0_i32, %c0_i32_0 : i32, i32
  }
  func.func @transform_2(%arg0: i32) -> (i32, i32) {
    %c0_i32 = arith.constant 0 : i32
    %c0_i32_0 = arith.constant 0 : i32
    %c0_i32_1 = arith.constant 0 : i32
    return %c0_i32, %c0_i32_0 : i32, i32
  }
  func.func @transform_3(%arg0: i32) -> (i32, i32) {
    %c0_i32 = arith.constant 0 : i32
    %c0_i32_0 = arith.constant 0 : i32
    %c0_i32_1 = arith.constant 0 : i32
    return %c0_i32, %c0_i32_0 : i32, i32
  }
  func.func @transform_4(%arg0: i32) -> (i32, i32) {
    %c0_i32 = arith.constant 0 : i32
    %c0_i32_0 = arith.constant 0 : i32
    %c0_i32_1 = arith.constant 0 : i32
    return %c0_i32, %c0_i32_0 : i32, i32
  }
  func.func @transform_5(%arg0: i32) -> (i32, i32) {
    %c0_i32 = arith.constant 0 : i32
    %c0_i32_0 = arith.constant 0 : i32
    %c0_i32_1 = arith.constant 0 : i32
    return %c0_i32, %c0_i32_0 : i32, i32
  }
  func.func @transform_6(%arg0: i32) -> (i32, i32) {
    %c0_i32 = arith.constant 0 : i32
    %c0_i32_0 = arith.constant 0 : i32
    return %arg0, %c0_i32 : i32, i32
  }
}

</mosaic_0001>

<llo_original>
// kernel: tpu_custom_call.1
$region0: #{tpu_custom_call.1}
  #allocation0 [shape = 'u32[]', space=smem, size = 0x4, offset = 0x4, fixed_abs, tag = 'smem constant byte address 0x4 - core index']
  #allocation1 [shape = 'u32[144,128]{1,0:T(1,128)}', space=vmem, size = 0x12000, scoped, tag = 'internal scratch']
  #allocation2 [shape = 'f32[8,128]{1,0:T(8,128)}', space=vmem, size = 0x1000, scoped, tag = 'scratch operand']
  #allocation3 [shape = 'f32[8,384]{1,0:T(8,128)}', space=vmem, size = 0x3000, scoped, tag = 'scratch operand']
  %s0 = inlined_call_operand.hbm [shape: f32[8,16], index: 0, kind: input, shape index: {}]
  %s1 = inlined_call_operand.hbm [shape: f32[8,128], index: 1, kind: input, shape index: {}]
  %s2 = inlined_call_operand.hbm [shape: f32[16,384], index: 2, kind: input, shape index: {}]
  %s3 = inlined_call_operand.hbm [shape: f32[128,384], index: 3, kind: input, shape index: {}]
  %s4 = inlined_call_operand.vmem [shape: f32[1,384], index: 4, kind: input, shape index: {}]
  %s5 = inlined_call_operand.vmem [shape: f32[1,128], index: 5, kind: input, shape index: {}]
  %s6 = inlined_call_operand.hbm [shape: f32[8,128], index: 6, kind: output, shape index: {}]
  %s7 = sld [smem:[#allocation0]]
  $region54: #{tpu_custom_call.1} parent=0
    _
  %s9 = ssub.s32 1, %s7
  %s10 = scalar_select 0, %s9, %s7
  $region1: #{tpu_custom_call.1} parent=0
    #allocation4 [shape = 'u8[4096]{0}', space=vmem, size = 0x1000, scoped, tag = 'input window, operand 0, single buffered']
    #allocation5 [shape = 's32[1]{0}', space=sflag, size = 0x4, scoped, tag = 'scoped memory for tpu_custom_call.1']
    #allocation6 [shape = 's32[1]{0}', space=sflag, size = 0x4, scoped, tag = 'scoped memory for tpu_custom_call.1']
    #allocation7 [shape = 'u8[4096]{0}', space=vmem, size = 0x1000, scoped, tag = 'input window, operand 1, single buffered']
    #allocation8 [shape = 's32[1]{0}', space=sflag, size = 0x4, scoped, tag = 'scoped memory for tpu_custom_call.1']
    #allocation9 [shape = 'u8[24576]{0}', space=vmem, size = 0x6000, scoped, tag = 'input window, operand 2, single buffered']
    #allocation10 [shape = 'u8[196608]{0}', space=vmem, size = 0x30000, scoped, tag = 'input window, operand 3, single buffered']
    #allocation11 [shape = 's32[1]{0}', space=sflag, size = 0x4, scoped, tag = 'scoped memory for tpu_custom_call.1']
    #allocation12 [shape = 'u8[4096]{0}', space=vmem, size = 0x1000, scoped, tag = 'output window, operand 0, single buffered']
    %11 = vsyncpa [#allocation5], 0
    %12 = vsyncpa [#allocation8], 0
    %13 = vsyncpa [#allocation11], 0
    %14 = vsyncpa [#allocation6], 0
    // Predicated region
    $region2: #{tpu_custom_call.1} parent=1 // pred_check
      _
    $region3: #{tpu_custom_call.1} parent=1 // pred_check_branch
      %16 = sbr.rel (0) target = $region5
    $region4: #{tpu_custom_call.1} parent=1 // pred_region
      %s18 = ssub.s32 128, 128
      %19 = vsyncadd [#allocation5], %s18
      %s21 = sshll.u32 [#allocation4], 4
      %s22 = int_to_ptr.vmem [resolvable:$true] %s21
      %24 = dma.hbm_to_vmem [thread:$0]  %s0, 128, %s22, [#allocation5]
    $region5: #{tpu_custom_call.1} parent=1 // pred_fallthru
      _
    // Predicated region
    $region6: #{tpu_custom_call.1} parent=1 // pred_check
      _
    $region7: #{tpu_custom_call.1} parent=1 // pred_check_branch
      %26 = sbr.rel (0) target = $region9
    $region8: #{tpu_custom_call.1} parent=1 // pred_region
      %s28 = ssub.s32 128, 128
      %29 = vsyncadd [#allocation8], %s28
      %s31 = sshll.u32 [#allocation7], 4
      %s32 = int_to_ptr.vmem [resolvable:$true] %s31
      %34 = dma.hbm_to_vmem [thread:$0]  %s1, 128, %s32, [#allocation8]
    $region9: #{tpu_custom_call.1} parent=1 // pred_fallthru
      _
    // Predicated region
    $region10: #{tpu_custom_call.1} parent=1 // pred_check
      _
    $region11: #{tpu_custom_call.1} parent=1 // pred_check_branch
      %36 = sbr.rel (0) target = $region13
    $region12: #{tpu_custom_call.1} parent=1 // pred_region
      %s38 = ssub.s32 768, 768
      %39 = vsyncadd [#allocation8], %s38
      %s40 = sshll.u32 [#allocation9], 4
      %s41 = int_to_ptr.vmem [resolvable:$true] %s40
      %46 = dma.hbm_to_vmem [thread:$0]  %s2, 768, %s41, [#allocation8], 384, 384, 24
    $region13: #{tpu_custom_call.1} parent=1 // pred_fallthru
      _
    // Predicated region
    $region14: #{tpu_custom_call.1} parent=1 // pred_check
      _
    $region15: #{tpu_custom_call.1} parent=1 // pred_check_branch
      %48 = sbr.rel (0) target = $region17
    $region16: #{tpu_custom_call.1} parent=1 // pred_region
      %s50 = ssub.s32 6144, 6144
      %51 = vsyncadd [#allocation11], %s50
      %s52 = sshll.u32 [#allocation10], 4
      %s53 = int_to_ptr.vmem [resolvable:$true] %s52
      %58 = dma.hbm_to_vmem [thread:$0]  %s3, 6144, %s53, [#allocation11], 384, 384, 24
    $region17: #{tpu_custom_call.1} parent=1 // pred_fallthru
      _
    // Predicated region
    $region18: #{tpu_custom_call.1} parent=1 // pred_check
      _
    $region19: #{tpu_custom_call.1} parent=1 // pred_check_branch
      %60 = sbr.rel (0) target = $region21
    $region20: #{tpu_custom_call.1} parent=1 // pred_region
      _
    $region21: #{tpu_custom_call.1} parent=1 // pred_fallthru
      _
    // Predicated region
    $region22: #{tpu_custom_call.1} parent=1 // pred_check
      _
    $region23: #{tpu_custom_call.1} parent=1 // pred_check_branch
      %62 = sbr.rel (0) target = $region25
    $region24: #{tpu_custom_call.1} parent=1 // pred_region
      _
    $region25: #{tpu_custom_call.1} parent=1 // pred_fallthru
      _
    // Predicated region
    $region26: #{tpu_custom_call.1} parent=1 // pred_check
      _
    $region27: #{tpu_custom_call.1} parent=1 // pred_check_branch
      %64 = sbr.rel (0) target = $region29
    $region28: #{tpu_custom_call.1} parent=1 // pred_region
      %65 = dma.done [#allocation5], 128
    $region29: #{tpu_custom_call.1} parent=1 // pred_fallthru
      _
    // Predicated region
    $region30: #{tpu_custom_call.1} parent=1 // pred_check
      _
    $region31: #{tpu_custom_call.1} parent=1 // pred_check_branch
      %67 = sbr.rel (0) target = $region33
    $region32: #{tpu_custom_call.1} parent=1 // pred_region
      %68 = dma.done [#allocation8], 128
    $region33: #{tpu_custom_call.1} parent=1 // pred_fallthru
      _
    // Predicated region
    $region34: #{tpu_custom_call.1} parent=1 // pred_check
      _
    $region35: #{tpu_custom_call.1} parent=1 // pred_check_branch
      %70 = sbr.rel (0) target = $region37
    $region36: #{tpu_custom_call.1} parent=1 // pred_region
      %71 = dma.done [#allocation8], 768
    $region37: #{tpu_custom_call.1} parent=1 // pred_fallthru
      _
    // Predicated region
    $region38: #{tpu_custom_call.1} parent=1 // pred_check
      _
    $region39: #{tpu_custom_call.1} parent=1 // pred_check_branch
      %73 = sbr.rel (0) target = $region41
    $region40: #{tpu_custom_call.1} parent=1 // pred_region
      %74 = dma.done [#allocation11], 6144
    $region41: #{tpu_custom_call.1} parent=1 // pred_fallthru
      _
    %p75 = scmp.eq.s32.totalorder 0, 0
    // Predicated region
    $region42: #{tpu_custom_call.1} parent=1 // pred_check
      %p76 = pneg %p75
    $region43: #{tpu_custom_call.1} parent=1 // pred_check_branch
      %78 = sbr.rel (%p76) target = $region45
    $region44: #{tpu_custom_call.1} parent=1 // pred_region
      %v79 = vld [vmem:[#allocation7] sm:$0xff]
      %80 = vst [vmem:[#allocation2] sm:$0xff] %v79
    $region45: #{tpu_custom_call.1} parent=1 // pred_fallthru
      _
    %v81 = vld [vmem:[#allocation4] sm:$0xff]
    %v82 = vld [vmem:[#allocation9] sm:$0xff]
    %v83 = vld [vmem:[#allocation9 + $0x8] sm:$0xff]
    %v84 = vld [vmem:[#allocation9 + $0x10] sm:$0xff]
    %v85 = vld [vmem:[#allocation9 + $0x18] sm:$0xff]
    %v86 = vld [vmem:[#allocation9 + $0x20] sm:$0xff]
    %v87 = vld [vmem:[#allocation9 + $0x28] sm:$0xff]
    %v88 = vld [vmem:[%s4] sm:$0x7]
    %v90 = vlaneseq
    %v91 = vshrl.u32 %v90, 7
    %v92 = vsub.s32 0, %v91
    %v93 = vrot.slane %v88, %v92
    %v94 = vlaneseq
    %v95 = vshrl.u32 %v94, 7
    %v96 = vsub.s32 1, %v95
    %v97 = vrot.slane %v88, %v96
    %v98 = vlaneseq
    %v99 = vshrl.u32 %v98, 7
    %v100 = vsub.s32 2, %v99
    %v101 = vrot.slane %v88, %v100
    %vm105 = vcmask 130048
    %v107 = vsel %vm105, %v81, 0
    %109 = vmatprep.subr.mxu0 %v83
    %110 = vmatpush1.msra.mxu0 %v82
    %111 = vmatprep.subr.mxu0 %v86
    %112 = vmatpush1.msra.mxu0 %v85
    %113 = vmatprep.subr.mxu0 0.0
    %114 = vmatpush1.msra.mxu0 0.0
    %115 = vmatprep.subr.mxu0 0.0
    %116 = vmatpush1.msra.mxu0 0.0
    %117 = vmatprep.subr.mxu0 0.0
    %118 = vmatpush1.msra.mxu0 0.0
    %119 = vmatprep.subr.mxu0 0.0
    %120 = vmatpush1.msra.mxu0 0.0
    %121 = vmatprep.subr.mxu0 0.0
    %122 = vmatpush1.msra.mxu0 0.0
    %123 = vmatprep.subr.mxu0 0.0
    %124 = vmatpush1.msra.mxu0 0.0
    %125 = vmatprep.subr.mxu0 0.0
    %126 = vmatpush1.msra.mxu0 0.0
    %127 = vmatprep.subr.mxu0 0.0
    %128 = vmatpush1.msra.mxu0 0.0
    %129 = vmatprep.subr.mxu0 0.0
    %130 = vmatpush1.msra.mxu0 0.0
    %131 = vmatprep.subr.mxu0 0.0
    %132 = vmatpush1.msra.mxu0 0.0
    %133 = vmatprep.subr.mxu0 0.0
    %134 = vmatpush1.msra.mxu0 0.0
    %135 = vmatprep.subr.mxu0 0.0
    %136 = vmatpush1.msra.mxu0 0.0
    %137 = vmatprep.subr.mxu0 0.0
    %138 = vmatpush1.msra.mxu0 0.0
    %139 = vmatprep.subr.mxu0 0.0
    %140 = vmatpush1.msra.mxu0 0.0
    %141 = vmatprep.subr.mxu0 0.0
    %142 = vmatpush1.msra.mxu0 0.0
    %143 = vmatprep.subr.mxu0 0.0
    %144 = vmatpush1.msra.mxu0 0.0
    %145 = vmatprep.subr.mxu0 0.0
    %146 = vmatpush1.msra.mxu0 0.0
    %147 = vmatprep.subr.mxu0 0.0
    %148 = vmatpush1.msra.mxu0 0.0
    %149 = vmatprep.subr.mxu0 0.0
    %150 = vmatpush1.msra.mxu0 0.0
    %151 = vmatprep.subr.mxu0 0.0
    %152 = vmatpush1.msra.mxu0 0.0
    %153 = vmatprep.subr.mxu0 0.0
    %154 = vmatpush1.msra.mxu0 0.0
    %155 = vmatprep.subr.mxu0 0.0
    %156 = vmatpush1.msra.mxu0 0.0
    %157 = vmatprep.subr.mxu0 0.0
    %158 = vmatpush1.msra.mxu0 0.0
    %159 = vmatprep.subr.mxu0 0.0
    %160 = vmatpush1.msra.mxu0 0.0
    %161 = vmatprep.subr.mxu0 0.0
    %162 = vmatpush1.msra.mxu0 0.0
    %163 = vmatprep.subr.mxu0 0.0
    %164 = vmatpush1.msra.mxu0 0.0
    %165 = vmatprep.subr.mxu0 0.0
    %166 = vmatpush1.msra.mxu0 0.0
    %167 = vmatprep.subr.mxu0 0.0
    %168 = vmatpush1.msra.mxu0 0.0
    %169 = vmatprep.subr.mxu0 0.0
    %170 = vmatpush1.msra.mxu0 0.0
    %171 = vmatprep.subr.mxu0 0.0
    %172 = vmatpush1.msra.mxu0 0.0
    %173 = vmatprep.mubr.f32.mxu0 0.0
    %174 = vmatmul.mubr.f32.gmra.mrb[0].mxu0 %v107
    %v175 = vpop.f32.mrb[0].mxu0
    %v176 = vadd.f32 %v93, %v175
    %v177 = vpop.f32.mrb[0].mxu0
    %v178 = vadd.f32 %v97, %v177
    %179 = vdwg.mxu0
    %180 = vmatprep.subr.mxu0 0.0
    %181 = vmatpush1.msra.mxu0 %v84
    %182 = vmatprep.subr.mxu0 0.0
    %183 = vmatpush1.msra.mxu0 %v87
    %184 = vmatprep.subr.mxu0 0.0
    %185 = vmatpush1.msra.mxu0 0.0
    %186 = vmatprep.subr.mxu0 0.0
    %187 = vmatpush1.msra.mxu0 0.0
    %188 = vmatprep.subr.mxu0 0.0
    %189 = vmatpush1.msra.mxu0 0.0
    %190 = vmatprep.subr.mxu0 0.0
    %191 = vmatpush1.msra.mxu0 0.0
    %192 = vmatprep.subr.mxu0 0.0
    %193 = vmatpush1.msra.mxu0 0.0
    %194 = vmatprep.subr.mxu0 0.0
    %195 = vmatpush1.msra.mxu0 0.0
    %196 = vmatprep.subr.mxu0 0.0
    %197 = vmatpush1.msra.mxu0 0.0
    %198 = vmatprep.subr.mxu0 0.0
    %199 = vmatpush1.msra.mxu0 0.0
    %200 = vmatprep.subr.mxu0 0.0
    %201 = vmatpush1.msra.mxu0 0.0
    %202 = vmatprep.subr.mxu0 0.0
    %203 = vmatpush1.msra.mxu0 0.0
    %204 = vmatprep.subr.mxu0 0.0
    %205 = vmatpush1.msra.mxu0 0.0
    %206 = vmatprep.subr.mxu0 0.0
    %207 = vmatpush1.msra.mxu0 0.0
    %208 = vmatprep.subr.mxu0 0.0
    %209 = vmatpush1.msra.mxu0 0.0
    %210 = vmatprep.subr.mxu0 0.0
    %211 = vmatpush1.msra.mxu0 0.0
    %212 = vmatprep.subr.mxu0 0.0
    %213 = vmatpush1.msra.mxu0 0.0
    %214 = vmatprep.subr.mxu0 0.0
    %215 = vmatpush1.msra.mxu0 0.0
    %216 = vmatprep.subr.mxu0 0.0
    %217 = vmatpush1.msra.mxu0 0.0
    %218 = vmatprep.subr.mxu0 0.0
    %219 = vmatpush1.msra.mxu0 0.0
    %220 = vmatprep.subr.mxu0 0.0
    %221 = vmatpush1.msra.mxu0 0.0
    %222 = vmatprep.subr.mxu0 0.0
    %223 = vmatpush1.msra.mxu0 0.0
    %224 = vmatprep.subr.mxu0 0.0
    %225 = vmatpush1.msra.mxu0 0.0
    %226 = vmatprep.subr.mxu0 0.0
    %227 = vmatpush1.msra.mxu0 0.0
    %228 = vmatprep.subr.mxu0 0.0
    %229 = vmatpush1.msra.mxu0 0.0
    %230 = vmatprep.subr.mxu0 0.0
    %231 = vmatpush1.msra.mxu0 0.0
    %232 = vmatprep.subr.mxu0 0.0
    %233 = vmatpush1.msra.mxu0 0.0
    %234 = vmatprep.subr.mxu0 0.0
    %235 = vmatpush1.msra.mxu0 0.0
    %236 = vmatprep.subr.mxu0 0.0
    %237 = vmatpush1.msra.mxu0 0.0
    %238 = vmatprep.subr.mxu0 0.0
    %239 = vmatpush1.msra.mxu0 0.0
    %240 = vmatprep.subr.mxu0 0.0
    %241 = vmatpush1.msra.mxu0 0.0
    %242 = vmatprep.subr.mxu0 0.0
    %243 = vmatpush1.msra.mxu0 0.0
    %244 = vmatprep.mubr.f32.mxu0 0.0
    %245 = vmatmul.mubr.f32.gmra.mrb[0].mxu0 %v107
    %v246 = vpop.f32.mrb[0].mxu0
    %v247 = vadd.f32 %v101, %v246
    %v248 = vpop.f32.mrb[0].mxu0
    %249 = vdwg.mxu0
    %250 = vst [vmem:[#allocation3] sm:$0xff] %v176
    %251 = vst [vmem:[#allocation3 + $0x8] sm:$0xff] %v178
    %252 = vst [vmem:[#allocation3 + $0x10] sm:$0xff] %v247
    %v253 = vld [vmem:[#allocation10] sm:$0xff]
    %v254 = vld [vmem:[#allocation10 + $0x8] sm:$0xff]
    %v255 = vld [vmem:[#allocation10 + $0x10] sm:$0xff]
    %v256 = vld [vmem:[#allocation10 + $0x18] sm:$0xff]
    %v257 = vld [vmem:[#allocation10 + $0x20] sm:$0xff]
    %v258 = vld [vmem:[#allocation10 + $0x28] sm:$0xff]
    %v259 = vld [vmem:[#allocation10 + $0x30] sm:$0xff]
    %v260 = vld [vmem:[#allocation10 + $0x38] sm:$0xff]
    %v261 = vld [vmem:[#allocation10 + $0x40] sm:$0xff]
    %v262 = vld [vmem:[#allocation10 + $0x48] sm:$0xff]
    %v263 = vld [vmem:[#allocation10 + $0x50] sm:$0xff]
    %v264 = vld [vmem:[#allocation10 + $0x58] sm:$0xff]
    %v265 = vld [vmem:[#allocation10 + $0x60] sm:$0xff]
    %v266 = vld [vmem:[#allocation10 + $0x68] sm:$0xff]
    %v267 = vld [vmem:[#allocation10 + $0x70] sm:$0xff]
    %v268 = vld [vmem:[#allocation10 + $0x78] sm:$0xff]
    %v269 = vld [vmem:[#allocation10 + $0x80] sm:$0xff]
    %v270 = vld [vmem:[#allocation10 + $0x88] sm:$0xff]
    %v271 = vld [vmem:[#allocation10 + $0x90] sm:$0xff]
    %v272 = vld [vmem:[#allocation10 + $0x98] sm:$0xff]
    %v273 = vld [vmem:[#allocation10 + $0xa0] sm:$0xff]
    %v274 = vld [vmem:[#allocation10 + $0xa8] sm:$0xff]
    %v275 = vld [vmem:[#allocation10 + $0xb0] sm:$0xff]
    %v276 = vld [vmem:[#allocation10 + $0xb8] sm:$0xff]
    %v277 = vld [vmem:[#allocation10 + $0xc0] sm:$0xff]
    %v278 = vld [vmem:[#allocation10 + $0xc8] sm:$0xff]
    %v279 = vld [vmem:[#allocation10 + $0xd0] sm:$0xff]
    %v280 = vld [vmem:[#allocation10 + $0xd8] sm:$0xff]
    %v281 = vld [vmem:[#allocation10 + $0xe0] sm:$0xff]
    %v282 = vld [vmem:[#allocation10 + $0xe8] sm:$0xff]
    %v283 = vld [vmem:[#allocation10 + $0xf0] sm:$0xff]
    %v284 = vld [vmem:[#allocation10 + $0xf8] sm:$0xff]
    %v285 = vld [vmem:[#allocation10 + $0x100] sm:$0xff]
    %v286 = vld [vmem:[#allocation10 + $0x108] sm:$0xff]
    %v287 = vld [vmem:[#allocation10 + $0x110] sm:$0xff]
    %v288 = vld [vmem:[#allocation10 + $0x118] sm:$0xff]
    %v289 = vld [vmem:[#allocation10 + $0x120] sm:$0xff]
    %v290 = vld [vmem:[#allocation10 + $0x128] sm:$0xff]
    %v291 = vld [vmem:[#allocation10 + $0x130] sm:$0xff]
    %v292 = vld [vmem:[#allocation10 + $0x138] sm:$0xff]
    %v293 = vld [vmem:[#allocation10 + $0x140] sm:$0xff]
    %v294 = vld [vmem:[#allocation10 + $0x148] sm:$0xff]
    %v295 = vld [vmem:[#allocation10 + $0x150] sm:$0xff]
    %v296 = vld [vmem:[#allocation10 + $0x158] sm:$0xff]
    %v297 = vld [vmem:[#allocation10 + $0x160] sm:$0xff]
    %v298 = vld [vmem:[#allocation10 + $0x168] sm:$0xff]
    %v299 = vld [vmem:[#allocation10 + $0x170] sm:$0xff]
    %v300 = vld [vmem:[#allocation10 + $0x178] sm:$0xff]
    %v301 = vld [vmem:[%s5] sm:$0x1]
    %v303 = vlaneseq
    %v304 = vshrl.u32 %v303, 7
    %v305 = vsub.s32 0, %v304
    %v306 = vrot.slane %v301, %v305
    %v308 = vld [vmem:[#allocation2] sm:$0xff]
    %309 = vmatprep.subr.mxu0 %v254
    %310 = vmatpush1.msra.mxu0 %v253
    %311 = vmatprep.subr.mxu0 %v257
    %312 = vmatpush1.msra.mxu0 %v256
    %313 = vmatprep.subr.mxu0 %v260
    %314 = vmatpush1.msra.mxu0 %v259
    %315 = vmatprep.subr.mxu0 %v263
    %316 = vmatpush1.msra.mxu0 %v262
    %317 = vmatprep.subr.mxu0 %v266
    %318 = vmatpush1.msra.mxu0 %v265
    %319 = vmatprep.subr.mxu0 %v269
    %320 = vmatpush1.msra.mxu0 %v268
    %321 = vmatprep.subr.mxu0 %v272
    %322 = vmatpush1.msra.mxu0 %v271
    %323 = vmatprep.subr.mxu0 %v275
    %324 = vmatpush1.msra.mxu0 %v274
    %325 = vmatprep.subr.mxu0 %v278
    %326 = vmatpush1.msra.mxu0 %v277
    %327 = vmatprep.subr.mxu0 %v281
    %328 = vmatpush1.msra.mxu0 %v280
    %329 = vmatprep.subr.mxu0 %v284
    %330 = vmatpush1.msra.mxu0 %v283
    %331 = vmatprep.subr.mxu0 %v287
    %332 = vmatpush1.msra.mxu0 %v286
    %333 = vmatprep.subr.mxu0 %v290
    %334 = vmatpush1.msra.mxu0 %v289
    %335 = vmatprep.subr.mxu0 %v293
    %336 = vmatpush1.msra.mxu0 %v292
    %337 = vmatprep.subr.mxu0 %v296
    %338 = vmatpush1.msra.mxu0 %v295
    %339 = vmatprep.subr.mxu0 %v299
    %340 = vmatpush1.msra.mxu0 %v298
    %341 = vmatprep.subr.mxu0 0.0
    %342 = vmatpush1.msra.mxu0 0.0
    %343 = vmatprep.subr.mxu0 0.0
    %344 = vmatpush1.msra.mxu0 0.0
    %345 = vmatprep.subr.mxu0 0.0
    %346 = vmatpush1.msra.mxu0 0.0
    %347 = vmatprep.subr.mxu0 0.0
    %348 = vmatpush1.msra.mxu0 0.0
    %349 = vmatprep.subr.mxu0 0.0
    %350 = vmatpush1.msra.mxu0 0.0
    %351 = vmatprep.subr.mxu0 0.0
    %352 = vmatpush1.msra.mxu0 0.0
    %353 = vmatprep.subr.mxu0 0.0
    %354 = vmatpush1.msra.mxu0 0.0
    %355 = vmatprep.subr.mxu0 0.0
    %356 = vmatpush1.msra.mxu0 0.0
    %357 = vmatprep.subr.mxu0 0.0
    %358 = vmatpush1.msra.mxu0 0.0
    %359 = vmatprep.subr.mxu0 0.0
    %360 = vmatpush1.msra.mxu0 0.0
    %361 = vmatprep.subr.mxu0 0.0
    %362 = vmatpush1.msra.mxu0 0.0
    %363 = vmatprep.subr.mxu0 0.0
    %364 = vmatpush1.msra.mxu0 0.0
    %365 = vmatprep.subr.mxu0 0.0
    %366 = vmatpush1.msra.mxu0 0.0
    %367 = vmatprep.subr.mxu0 0.0
    %368 = vmatpush1.msra.mxu0 0.0
    %369 = vmatprep.subr.mxu0 0.0
    %370 = vmatpush1.msra.mxu0 0.0
    %371 = vmatprep.subr.mxu0 0.0
    %372 = vmatpush1.msra.mxu0 0.0
    %373 = vmatprep.mubr.f32.mxu0 0.0
    %374 = vmatmul.mubr.f32.gmra.mrb[0].mxu0 %v308
    %v375 = vpop.f32.mrb[0].mxu0
    %v376 = vadd.f32 0.0, %v375
    %v377 = vpop.f32.mrb[0].mxu0
    %v378 = vadd.f32 0.0, %v377
    %379 = vdwg.mxu0
    %380 = vmatprep.subr.mxu0 0.0
    %381 = vmatpush1.msra.mxu0 %v255
    %382 = vmatprep.subr.mxu0 0.0
    %383 = vmatpush1.msra.mxu0 %v258
    %384 = vmatprep.subr.mxu0 0.0
    %385 = vmatpush1.msra.mxu0 %v261
    %386 = vmatprep.subr.mxu0 0.0
    %387 = vmatpush1.msra.mxu0 %v264
    %388 = vmatprep.subr.mxu0 0.0
    %389 = vmatpush1.msra.mxu0 %v267
    %390 = vmatprep.subr.mxu0 0.0
    %391 = vmatpush1.msra.mxu0 %v270
    %392 = vmatprep.subr.mxu0 0.0
    %393 = vmatpush1.msra.mxu0 %v273
    %394 = vmatprep.subr.mxu0 0.0
    %395 = vmatpush1.msra.mxu0 %v276
    %396 = vmatprep.subr.mxu0 0.0
    %397 = vmatpush1.msra.mxu0 %v279
    %398 = vmatprep.subr.mxu0 0.0
    %399 = vmatpush1.msra.mxu0 %v282
    %400 = vmatprep.subr.mxu0 0.0
    %401 = vmatpush1.msra.mxu0 %v285
    %402 = vmatprep.subr.mxu0 0.0
    %403 = vmatpush1.msra.mxu0 %v288
    %404 = vmatprep.subr.mxu0 0.0
    %405 = vmatpush1.msra.mxu0 %v291
    %406 = vmatprep.subr.mxu0 0.0
    %407 = vmatpush1.msra.mxu0 %v294
    %408 = vmatprep.subr.mxu0 0.0
    %409 = vmatpush1.msra.mxu0 %v297
    %410 = vmatprep.subr.mxu0 0.0
    %411 = vmatpush1.msra.mxu0 %v300
    %412 = vmatprep.subr.mxu0 0.0
    %413 = vmatpush1.msra.mxu0 0.0
    %414 = vmatprep.subr.mxu0 0.0
    %415 = vmatpush1.msra.mxu0 0.0
    %416 = vmatprep.subr.mxu0 0.0
    %417 = vmatpush1.msra.mxu0 0.0
    %418 = vmatprep.subr.mxu0 0.0
    %419 = vmatpush1.msra.mxu0 0.0
    %420 = vmatprep.subr.mxu0 0.0
    %421 = vmatpush1.msra.mxu0 0.0
    %422 = vmatprep.subr.mxu0 0.0
    %423 = vmatpush1.msra.mxu0 0.0
    %424 = vmatprep.subr.mxu0 0.0
    %425 = vmatpush1.msra.mxu0 0.0
    %426 = vmatprep.subr.mxu0 0.0
    %427 = vmatpush1.msra.mxu0 0.0
    %428 = vmatprep.subr.mxu0 0.0
    %429 = vmatpush1.msra.mxu0 0.0
    %430 = vmatprep.subr.mxu0 0.0
    %431 = vmatpush1.msra.mxu0 0.0
    %432 = vmatprep.subr.mxu0 0.0
    %433 = vmatpush1.msra.mxu0 0.0
    %434 = vmatprep.subr.mxu0 0.0
    %435 = vmatpush1.msra.mxu0 0.0
    %436 = vmatprep.subr.mxu0 0.0
    %437 = vmatpush1.msra.mxu0 0.0
    %438 = vmatprep.subr.mxu0 0.0
    %439 = vmatpush1.msra.mxu0 0.0
    %440 = vmatprep.subr.mxu0 0.0
    %441 = vmatpush1.msra.mxu0 0.0
    %442 = vmatprep.subr.mxu0 0.0
    %443 = vmatpush1.msra.mxu0 0.0
    %444 = vmatprep.mubr.f32.mxu0 0.0
    %445 = vmatmul.mubr.f32.gmra.mrb[0].mxu0 %v308
    %v446 = vpop.f32.mrb[0].mxu0
    %v447 = vadd.f32 0.0, %v446
    %v448 = vpop.f32.mrb[0].mxu0
    %449 = vdwg.mxu0
    %s450 = smul.u32 0, 3
    %s451 = smul.addr %s450, 8
    %s452 = scalar_lea.vmem [#allocation3], %s451
    %v453 = vld [vmem:[%s452] sm:$0xff]
    %v454 = vld [vmem:[%s452 + $0x8] sm:$0xff]
    %v455 = vld [vmem:[%s452 + $0x10] sm:$0xff]
    %v456 = vadd.f32 %v453, %v376
    %v457 = vxor.u32 %v456, 2147483648
    %v458 = vmul.f32 %v457, 1.442695
    %v459 = vpow.pop %v458
    %v460 = vadd.f32 %v459, 1.0
    %v461 = vrcp.pop %v460
    %v462 = vmul.f32 1.0, %v461
    %v463 = vadd.f32 %v454, %v378
    %v464 = vxor.u32 %v463, 2147483648
    %v465 = vmul.f32 %v464, 1.442695
    %v466 = vpow.pop %v465
    %v467 = vadd.f32 %v466, 1.0
    %v468 = vrcp.pop %v467
    %v469 = vmul.f32 1.0, %v468
    %v470 = vadd.f32 %v447, %v306
    %v471 = vmul.f32 %v462, %v470
    %v472 = vadd.f32 %v455, %v471
    %v473 = vtanh.pop %v472
    %v474 = vsub.f32 1.0, %v469
    %v475 = vmul.f32 %v474, %v473
    %v476 = vmul.f32 %v469, %v308
    %v477 = vadd.f32 %v475, %v476
    %478 = vst [vmem:[#allocation12] sm:$0xff] %v477
    %479 = vst [vmem:[#allocation2] sm:$0xff] %v477
    // Predicated region
    $region46: #{tpu_custom_call.1} parent=1 // pred_check
      _
    $region47: #{tpu_custom_call.1} parent=1 // pred_check_branch
      %481 = sbr.rel (0) target = $region49
    $region48: #{tpu_custom_call.1} parent=1 // pred_region
      %s483 = ssub.s32 128, 128
      %484 = vsyncadd [#allocation6], %s483
      %s486 = sshll.u32 [#allocation12], 4
      %s487 = int_to_ptr.vmem [resolvable:$true] %s486
      %489 = dma.vmem_to_hbm [thread:$0]  %s487, 128, %s6, [#allocation6]
    $region49: #{tpu_custom_call.1} parent=1 // pred_fallthru
      _
    // Predicated region
    $region50: #{tpu_custom_call.1} parent=1 // pred_check
      _
    $region51: #{tpu_custom_call.1} parent=1 // pred_check_branch
      %491 = sbr.rel (0) target = $region53
    $region52: #{tpu_custom_call.1} parent=1 // pred_region
      %492 = dma.done [#allocation6], 128
    $region53: #{tpu_custom_call.1} parent=1 // pred_fallthru
      _
    %493 = vsyncpa [#allocation5], 1
    %494 = vsyncpa [#allocation8], 1
    %495 = vsyncpa [#allocation11], 1
    %496 = vsyncpa [#allocation6], 1

</llo_original>
